<compile_context>
chip_gen: v5e
topology: v5e:2x2
jax: 0.10.0
libtpu: 0.0.40
codegen_flags: <defaults>
</compile_context>

<pallas_src>
import jax
import jax.numpy as jnp
import numpy as np
from jax import lax
from jax.experimental import pallas as pl
from jax.experimental.pallas import tpu as pltpu


def _round_up(v: int, m: int) -> int:
    return -(-v // m) * m


def _attn_pool_kernel(x_ref, pos0_ref, posx_ref, mask_ref,
                      wq_ref, bq_ref,
                      wkv_ref, bkv_ref,
                      wc_ref, bc_ref,
                      o_ref):
    Bt, T, C = x_ref.shape
    H = mask_ref.shape[1]
    f32 = jnp.float32

    x = x_ref[...]                                      # (Bt, T, C) bf16
    head_mask = mask_ref[...]                           # (C, H) f32

    # Mean token (f32 for accuracy) + its positional embedding; kept as a
    # separate row block so the unaligned (T+1, C) concat never materializes
    # on the lane/sublane grid in an awkward way.
    mean_tok = jnp.mean(x.astype(f32), axis=1)          # (Bt, C)
    seq_m = mean_tok + pos0_ref[...].astype(f32)        # (Bt, C) f32
    seq_m_lp = seq_m.astype(x.dtype)                    # bf16 MXU operand

    # Temporal tokens + positional embedding, flattened to rows.
    seq_x = (x + posx_ref[...][None]).reshape(Bt * T, C)    # (Bt*T, C) bf16

    # Single fused k/v projection over [temporal rows ; mean rows].
    rows = jnp.concatenate([seq_x, seq_m_lp], axis=0)        # (Bt*(T+1), C)
    kv = lax.dot_general(rows, wkv_ref[...], (((1,), (1,)), ((), ())),
                         preferred_element_type=f32)
    kv = kv + bkv_ref[...].astype(f32)                       # (Bt*(T+1), 2C)
    k_x = kv[: Bt * T, :C].reshape(Bt, T, C)
    v_x = kv[: Bt * T, C:].reshape(Bt, T, C)
    k_m = kv[Bt * T:, :C]                                    # (Bt, C)
    v_m = kv[Bt * T:, C:]                                    # (Bt, C)

    # q projection of the mean token (1/sqrt(head_dim) folded into wq/bq).
    q = lax.dot_general(seq_m_lp, wq_ref[...], (((1,), (1,)), ((), ())),
                        preferred_element_type=f32)
    q = q + bq_ref[...].astype(f32)                          # (Bt, C)

    # Per-head scores via elementwise product + head-segment-sum matmul.
    prod_x = (q[:, None, :] * k_x).reshape(Bt * T, C)
    s_x = lax.dot_general(prod_x, head_mask, (((1,), (0,)), ((), ())),
                          preferred_element_type=f32).reshape(Bt, T, H)
    s_m = lax.dot_general(q * k_m, head_mask, (((1,), (0,)), ((), ())),
                          preferred_element_type=f32)        # (Bt, H)

    # Softmax over the T+1 keys, all in f32.
    m = jnp.maximum(jnp.max(s_x, axis=1), s_m)               # (Bt, H)
    p_x = jnp.exp(s_x - m[:, None, :])                       # (Bt, T, H)
    p_m = jnp.exp(s_m - m)                                   # (Bt, H)
    inv = pl.reciprocal(jnp.sum(p_x, axis=1) + p_m, approx=True)
    p_x = p_x * inv[:, None, :]
    p_m = p_m * inv

    # Broadcast head probabilities back to channels and reduce over keys.
    pe_x = lax.dot_general(p_x.reshape(Bt * T, H), head_mask,
                           (((1,), (1,)), ((), ())),
                           preferred_element_type=f32).reshape(Bt, T, C)
    pe_m = lax.dot_general(p_m, head_mask, (((1,), (1,)), ((), ())),
                           preferred_element_type=f32)       # (Bt, C)
    attn = jnp.sum(pe_x * v_x, axis=1) + pe_m * v_m          # (Bt, C) f32

    # Output projection -> lane-dense (Bt, O) store.
    out = lax.dot_general(attn.astype(wc_ref.dtype), wc_ref[...],
                          (((1,), (1,)), ((), ())),
                          preferred_element_type=f32)
    o_ref[...] = (out + bc_ref[...].astype(f32)).astype(o_ref.dtype)


def attention_pool_1d(x, params, num_heads, *, batch_tile=16,
                      param_dtype=jnp.bfloat16):
    """x: (N, C, T) float32.  Returns (N, 1, output_dim)."""
    N, C, T = x.shape
    O = params["wc"].shape[0]
    D = C // num_heads
    scale = float(D) ** -0.5

    # One-time layout change to lane-dense (N, T, C) + bf16 MXU operand.
    # (Profile-dependent: for very large N this extra HBM pass over x could be
    # folded into the kernel by consuming (Bt, C, T) blocks; weights dominate
    # at these shapes, so keep it here.)
    x_tc = jnp.transpose(x, (0, 2, 1)).astype(param_dtype)

    # Batch tile: multiple of 8; default Bt*T=256 fills the v6e/v7x MXU M-dim
    # (use batch_tile=8 on v5e); keep >= 2 grid blocks when N allows so both
    # v7x TensorCores get work.
    bt_cap = max(8, (int(batch_tile) // 8) * 8)
    Bt = min(bt_cap, _round_up(pl.cdiv(max(N, 1), 2), 8))
    n_blocks = pl.cdiv(max(N, 1), Bt)
    N_pad = n_blocks * Bt
    if N_pad != N:
        x_tc = jnp.pad(x_tc, ((0, N_pad - N), (0, 0), (0, 0)))

    # Parameter prep (once, in XLA): bf16 weights, f32 biases, 1/sqrt(head_dim)
    # folded into the q projection, wk/wv stacked for one fused k/v matmul.
    pos = params["pos"]
    pos0 = pos[0:1].astype(jnp.float32)                        # (1, C)
    posx = pos[1:].astype(param_dtype)                         # (T, C)
    wq = (params["wq"] * scale).astype(param_dtype)            # (C, C)
    bq = (params["bq"] * scale).astype(jnp.float32)            # (1, C)
    wkv = jnp.concatenate([params["wk"], params["wv"]], 0).astype(param_dtype)
    bkv = jnp.concatenate([params["bk"], params["bv"]], 1).astype(jnp.float32)
    wc = params["wc"].astype(param_dtype)                      # (O, C)
    bc = params["bc"].astype(jnp.float32)                      # (1, O)

    # (C, H) head-segment mask: channel c belongs to head c // D.
    head_mask = jnp.asarray(
        (np.arange(C)[:, None] // D) == np.arange(num_heads)[None, :],
        jnp.float32)

    # Constant-index blocks stay resident across the grid -> single buffer.
    def const_spec(shape):
        return pl.BlockSpec(shape, lambda b: (0,) * len(shape),
                            pipeline_mode=pl.Buffered(1))

    # VMEM budget: double-buffered x/out tiles + single-buffered weights +
    # headroom for f32 intermediates; clamp to [32 MiB, 64 MiB] (valid on
    # v5e/v6e 128 MiB and v7x 64 MiB physical VMEM).
    itm = jnp.dtype(param_dtype).itemsize
    est = (2 * (Bt * T * C * itm + Bt * O * 4)
           + (3 * C * C + O * C) * itm
           + ((T + 1) * C + C * num_heads + 3 * C + O) * 4
           + 4 * Bt * (T + 1) * 2 * C * 4)
    vmem_limit = int(min(64 << 20, max(32 << 20, 2 * est)))

    out = pl.pallas_call(
        _attn_pool_kernel,
        out_shape=jax.ShapeDtypeStruct((N_pad, O), x.dtype),
        grid_spec=pltpu.PrefetchScalarGridSpec(
            num_scalar_prefetch=0,
            grid=(n_blocks,),
            in_specs=[
                pl.BlockSpec((Bt, T, C), lambda b: (b, 0, 0)),   # x (N,T,C)
                const_spec((1, C)),                              # pos[0]
                const_spec((T, C)),                              # pos[1:]
                const_spec((C, num_heads)),                      # head mask
                const_spec((C, C)), const_spec((1, C)),          # wq, bq
                const_spec((2 * C, C)), const_spec((1, 2 * C)),  # wkv, bkv
                const_spec((O, C)), const_spec((1, O)),          # wc, bc
            ],
            out_specs=pl.BlockSpec((Bt, O), lambda b: (b, 0)),
        ),
        compiler_params=pltpu.CompilerParams(
            dimension_semantics=("parallel",),
            vmem_limit_bytes=vmem_limit),
    )(x_tc, pos0, posx, head_mask, wq, bq, wkv, bkv, wc, bc)

    return out[:N][:, None, :]                                   # (N, 1, O)


def reference_forward(x, params, num_heads):
    """Pure-JAX f32 reference matching F.multi_head_attention_forward."""
    N, C, T = x.shape
    H = num_heads
    D = C // H
    L = T + 1
    pos = params["pos"]
    wq, bq = params["wq"], params["bq"][0]
    wk, bk = params["wk"], params["bk"][0]
    wv, bv = params["wv"], params["bv"][0]
    wc, bc = params["wc"], params["bc"][0]

    xt = jnp.transpose(x, (2, 0, 1))                              # (T, N, C)
    seq = jnp.concatenate([xt.mean(0, keepdims=True), xt], 0)     # (L, N, C)
    seq = seq + pos[:, None, :]

    q = (seq[:1] @ wq.T + bq) * (D ** -0.5)                       # (1, N, C)
    k = seq @ wk.T + bk                                           # (L, N, C)
    v = seq @ wv.T + bv

    qh = q.reshape(1, N, H, D).transpose(1, 2, 0, 3)              # (N, H, 1, D)
    kh = k.reshape(L, N, H, D).transpose(1, 2, 0, 3)              # (N, H, L, D)
    vh = v.reshape(L, N, H, D).transpose(1, 2, 0, 3)
    s = jnp.einsum('nhqd,nhld->nhql', qh, kh)
    p = jax.nn.softmax(s, axis=-1)
    o = jnp.einsum('nhql,nhld->nhqd', p, vh)                      # (N, H, 1, D)
    o = o.transpose(0, 2, 1, 3).reshape(N, 1, C)
    return o @ wc.T + bc                                          # (N, 1, O)


def _make_params(key, C, T, O):
    L = T + 1
    keys = jax.random.split(key, 9)
    return {
        "pos": (jax.random.normal(keys[0], (L, C), jnp.float32) / (C ** 0.5)),
        "wq": jax.random.normal(keys[1], (C, C), jnp.float32) * 0.05,
        "bq": jax.random.normal(keys[2], (1, C), jnp.float32) * 0.01,
        "wk": jax.random.normal(keys[3], (C, C), jnp.float32) * 0.05,
        "bk": jax.random.normal(keys[4], (1, C), jnp.float32) * 0.01,
        "wv": jax.random.normal(keys[5], (C, C), jnp.float32) * 0.05,
        "bv": jax.random.normal(keys[6], (1, C), jnp.float32) * 0.01,
        "wc": jax.random.normal(keys[7], (O, C), jnp.float32) * 0.05,
        "bc": jax.random.normal(keys[8], (1, O), jnp.float32) * 0.01,
    }


if __name__ == "__main__":
    key = jax.random.PRNGKey(0)
    k_params, k_x1, k_params2, k_x2 = jax.random.split(key, 4)

    # bf16 MXU operands vs. an f32 reference -> loosened (but still tight
    # enough to catch real bugs) tolerances.
    RTOL, ATOL = 2e-2, 2e-2

    # Case 1: small shapes consistent with the module (single grid block).
    N, C, T, H, O = 2, 32, 16, 4, 32
    params = _make_params(k_params, C, T, O)
    x = jax.random.normal(k_x1, (N, C, T), jnp.float32)

    out = jax.block_until_ready(attention_pool_1d(x, params, num_heads=H))
    ref = jax.block_until_ready(reference_forward(x, params, num_heads=H))
    np.testing.assert_allclose(np.asarray(out, np.float32), np.asarray(ref),
                               rtol=RTOL, atol=ATOL)

    # Case 2: batch not a multiple of the tile -> padding + 2-block grid.
    N2, O2 = 9, 16
    params2 = _make_params(k_params2, C, T, O2)
    x2 = jax.random.normal(k_x2, (N2, C, T), jnp.float32)

    out2 = jax.block_until_ready(attention_pool_1d(x2, params2, num_heads=H))
    ref2 = jax.block_until_ready(reference_forward(x2, params2, num_heads=H))
    np.testing.assert_allclose(np.asarray(out2, np.float32), np.asarray(ref2),
                               rtol=RTOL, atol=ATOL)

    print("KERNEL_OK")
</pallas_src>

<mosaic_0001>
module attributes {stable_mosaic.version = 11 : i64} {
  func.func @_attn_pool_kernel(%arg0: i32, %arg1: memref<8x16x32xbf16, #tpu.memory_space<vmem>>, %arg2: memref<1x32xf32, #tpu.memory_space<vmem>>, %arg3: memref<16x32xbf16, #tpu.memory_space<vmem>>, %arg4: memref<32x4xf32, #tpu.memory_space<vmem>>, %arg5: memref<32x32xbf16, #tpu.memory_space<vmem>>, %arg6: memref<1x32xf32, #tpu.memory_space<vmem>>, %arg7: memref<64x32xbf16, #tpu.memory_space<vmem>>, %arg8: memref<1x64xf32, #tpu.memory_space<vmem>>, %arg9: memref<32x32xbf16, #tpu.memory_space<vmem>>, %arg10: memref<1x32xf32, #tpu.memory_space<vmem>>, %arg11: memref<8x32xf32, #tpu.memory_space<vmem>>) attributes {dimension_semantics = [#tpu.dimension_semantics<parallel>], iteration_bounds = array<i64: 1>, scalar_prefetch = 0 : i64, scratch_operands = 0 : i64, tpu.core_type = #tpu.core_type<tc>, window_params = [{transform_indices = @transform_0, window_bounds = array<i64: 8, 16, 32>}, {pipeline_mode = #tpu.pipeline_mode<synchronous>, transform_indices = @transform_1, window_bounds = array<i64: 1, 32>}, {pipeline_mode = #tpu.pipeline_mode<synchronous>, transform_indices = @transform_2, window_bounds = array<i64: 16, 32>}, {pipeline_mode = #tpu.pipeline_mode<synchronous>, transform_indices = @transform_3, window_bounds = array<i64: 32, 4>}, {pipeline_mode = #tpu.pipeline_mode<synchronous>, transform_indices = @transform_4, window_bounds = array<i64: 32, 32>}, {pipeline_mode = #tpu.pipeline_mode<synchronous>, transform_indices = @transform_5, window_bounds = array<i64: 1, 32>}, {pipeline_mode = #tpu.pipeline_mode<synchronous>, transform_indices = @transform_6, window_bounds = array<i64: 64, 32>}, {pipeline_mode = #tpu.pipeline_mode<synchronous>, transform_indices = @transform_7, window_bounds = array<i64: 1, 64>}, {pipeline_mode = #tpu.pipeline_mode<synchronous>, transform_indices = @transform_8, window_bounds = array<i64: 32, 32>}, {pipeline_mode = #tpu.pipeline_mode<synchronous>, transform_indices = @transform_9, window_bounds = array<i64: 1, 32>}, {transform_indices = @transform_10, window_bounds = array<i64: 8, 32>}]} {
    %c0 = arith.constant 0 : index
    %c0_0 = arith.constant 0 : index
    %c0_1 = arith.constant 0 : index
    %0 = vector.load %arg1[%c0, %c0_0, %c0_1] : memref<8x16x32xbf16, #tpu.memory_space<vmem>>, vector<8x16x32xbf16>
    %c0_2 = arith.constant 0 : index
    %c0_3 = arith.constant 0 : index
    %1 = vector.load %arg4[%c0_2, %c0_3] : memref<32x4xf32, #tpu.memory_space<vmem>>, vector<32x4xf32>
    %2 = arith.extf %0 : vector<8x16x32xbf16> to vector<8x16x32xf32>
    %cst = arith.constant dense<0.000000e+00> : vector<8x32xf32>
    %3 = vector.multi_reduction <add>, %2, %cst [1] : vector<8x16x32xf32> to vector<8x32xf32>
    %cst_4 = arith.constant 1.600000e+01 : f32
    %4 = vector.broadcast %cst_4 : f32 to vector<8x32xf32>
    %5 = arith.divf %3, %4 : vector<8x32xf32>
    %c0_5 = arith.constant 0 : index
    %c0_6 = arith.constant 0 : index
    %6 = vector.load %arg2[%c0_5, %c0_6] : memref<1x32xf32, #tpu.memory_space<vmem>>, vector<1x32xf32>
    %7 = vector.broadcast %6 : vector<1x32xf32> to vector<8x32xf32>
    %8 = arith.addf %5, %7 : vector<8x32xf32>
    %9 = arith.truncf %8 : vector<8x32xf32> to vector<8x32xbf16>
    %c0_7 = arith.constant 0 : index
    %c0_8 = arith.constant 0 : index
    %10 = vector.load %arg3[%c0_7, %c0_8] : memref<16x32xbf16, #tpu.memory_space<vmem>>, vector<16x32xbf16>
    %11 = vector.shape_cast %10 : vector<16x32xbf16> to vector<1x16x32xbf16>
    %12 = vector.broadcast %11 : vector<1x16x32xbf16> to vector<8x16x32xbf16>
    %13 = arith.addf %0, %12 : vector<8x16x32xbf16>
    %14 = vector.shape_cast %13 : vector<8x16x32xbf16> to vector<128x32xbf16>
    %15 = tpu.concatenate %14, %9 in 0 : vector<128x32xbf16>, vector<8x32xbf16> -> vector<136x32xbf16>
    %c0_9 = arith.constant 0 : index
    %c0_10 = arith.constant 0 : index
    %16 = vector.load %arg7[%c0_9, %c0_10] : memref<64x32xbf16, #tpu.memory_space<vmem>>, vector<64x32xbf16>
    %cst_11 = arith.constant dense<0.000000e+00> : vector<136x64xf32>
    %17 = tpu.matmul %15, %16, %cst_11 {dimension_numbers = #tpu.dot_dimension_numbers<[1], [1], [0], [0], [0, 0, 1, 0], [], []>} : vector<136x32xbf16>, vector<64x32xbf16>, vector<136x64xf32> -> vector<136x64xf32>
    %c0_12 = arith.constant 0 : index
    %c0_13 = arith.constant 0 : index
    %18 = vector.load %arg8[%c0_12, %c0_13] : memref<1x64xf32, #tpu.memory_space<vmem>>, vector<1x64xf32>
    %19 = vector.broadcast %18 : vector<1x64xf32> to vector<136x64xf32>
    %20 = arith.addf %17, %19 : vector<136x64xf32>
    %21 = vector.extract_strided_slice %20 {offsets = [0, 0], sizes = [128, 32], strides = [1, 1]} : vector<136x64xf32> to vector<128x32xf32>
    %22 = vector.shape_cast %21 : vector<128x32xf32> to vector<8x16x32xf32>
    %23 = vector.extract_strided_slice %20 {offsets = [0, 32], sizes = [128, 32], strides = [1, 1]} : vector<136x64xf32> to vector<128x32xf32>
    %24 = vector.shape_cast %23 : vector<128x32xf32> to vector<8x16x32xf32>
    %25 = vector.extract_strided_slice %20 {offsets = [128, 0], sizes = [8, 32], strides = [1, 1]} : vector<136x64xf32> to vector<8x32xf32>
    %26 = vector.extract_strided_slice %20 {offsets = [128, 32], sizes = [8, 32], strides = [1, 1]} : vector<136x64xf32> to vector<8x32xf32>
    %c0_14 = arith.constant 0 : index
    %c0_15 = arith.constant 0 : index
    %27 = vector.load %arg5[%c0_14, %c0_15] : memref<32x32xbf16, #tpu.memory_space<vmem>>, vector<32x32xbf16>
    %cst_16 = arith.constant dense<0.000000e+00> : vector<8x32xf32>
    %28 = tpu.matmul %9, %27, %cst_16 {dimension_numbers = #tpu.dot_dimension_numbers<[1], [1], [0], [0], [0, 0, 1, 0], [], []>} : vector<8x32xbf16>, vector<32x32xbf16>, vector<8x32xf32> -> vector<8x32xf32>
    %c0_17 = arith.constant 0 : index
    %c0_18 = arith.constant 0 : index
    %29 = vector.load %arg6[%c0_17, %c0_18] : memref<1x32xf32, #tpu.memory_space<vmem>>, vector<1x32xf32>
    %30 = vector.broadcast %29 : vector<1x32xf32> to vector<8x32xf32>
    %31 = arith.addf %28, %30 : vector<8x32xf32>
    %32 = vector.shape_cast %31 : vector<8x32xf32> to vector<8x1x32xf32>
    %33 = vector.broadcast %32 : vector<8x1x32xf32> to vector<8x16x32xf32>
    %34 = arith.mulf %33, %22 : vector<8x16x32xf32>
    %35 = vector.shape_cast %34 : vector<8x16x32xf32> to vector<128x32xf32>
    %cst_19 = arith.constant dense<0.000000e+00> : vector<128x4xf32>
    %36 = tpu.matmul %35, %1, %cst_19 {dimension_numbers = #tpu.dot_dimension_numbers<[1], [0], [0], [1], [0, 0, 1, 1], [], []>} : vector<128x32xf32>, vector<32x4xf32>, vector<128x4xf32> -> vector<128x4xf32>
    %37 = vector.shape_cast %36 : vector<128x4xf32> to vector<8x16x4xf32>
    %38 = arith.mulf %31, %25 : vector<8x32xf32>
    %cst_20 = arith.constant dense<0.000000e+00> : vector<8x4xf32>
    %39 = tpu.matmul %38, %1, %cst_20 {dimension_numbers = #tpu.dot_dimension_numbers<[1], [0], [0], [1], [0, 0, 1, 1], [], []>} : vector<8x32xf32>, vector<32x4xf32>, vector<8x4xf32> -> vector<8x4xf32>
    %cst_21 = arith.constant dense<0xFF800000> : vector<8x4xf32>
    %40 = vector.multi_reduction <maximumf>, %37, %cst_21 [1] : vector<8x16x4xf32> to vector<8x4xf32>
    %41 = arith.maximumf %40, %39 : vector<8x4xf32>
    %42 = vector.shape_cast %41 : vector<8x4xf32> to vector<8x1x4xf32>
    %43 = vector.broadcast %42 : vector<8x1x4xf32> to vector<8x16x4xf32>
    %44 = arith.subf %37, %43 : vector<8x16x4xf32>
    %45 = math.exp %44 : vector<8x16x4xf32>
    %46 = arith.subf %39, %41 : vector<8x4xf32>
    %47 = math.exp %46 : vector<8x4xf32>
    %cst_22 = arith.constant dense<0.000000e+00> : vector<8x4xf32>
    %48 = vector.multi_reduction <add>, %45, %cst_22 [1] : vector<8x16x4xf32> to vector<8x4xf32>
    %49 = arith.addf %48, %47 : vector<8x4xf32>
    %50 = tpu.reciprocal %49 {approx = true} : vector<8x4xf32> -> vector<8x4xf32>
    %51 = vector.shape_cast %50 : vector<8x4xf32> to vector<8x1x4xf32>
    %52 = vector.broadcast %51 : vector<8x1x4xf32> to vector<8x16x4xf32>
    %53 = arith.mulf %45, %52 : vector<8x16x4xf32>
    %54 = arith.mulf %47, %50 : vector<8x4xf32>
    %55 = vector.shape_cast %53 : vector<8x16x4xf32> to vector<128x4xf32>
    %cst_23 = arith.constant dense<0.000000e+00> : vector<128x32xf32>
    %56 = tpu.matmul %55, %1, %cst_23 {dimension_numbers = #tpu.dot_dimension_numbers<[1], [1], [0], [0], [0, 0, 1, 0], [], []>} : vector<128x4xf32>, vector<32x4xf32>, vector<128x32xf32> -> vector<128x32xf32>
    %57 = vector.shape_cast %56 : vector<128x32xf32> to vector<8x16x32xf32>
    %cst_24 = arith.constant dense<0.000000e+00> : vector<8x32xf32>
    %58 = tpu.matmul %54, %1, %cst_24 {dimension_numbers = #tpu.dot_dimension_numbers<[1], [1], [0], [0], [0, 0, 1, 0], [], []>} : vector<8x4xf32>, vector<32x4xf32>, vector<8x32xf32> -> vector<8x32xf32>
    %59 = arith.mulf %57, %24 : vector<8x16x32xf32>
    %cst_25 = arith.constant dense<0.000000e+00> : vector<8x32xf32>
    %60 = vector.multi_reduction <add>, %59, %cst_25 [1] : vector<8x16x32xf32> to vector<8x32xf32>
    %61 = arith.mulf %58, %26 : vector<8x32xf32>
    %62 = arith.addf %60, %61 : vector<8x32xf32>
    %63 = arith.truncf %62 : vector<8x32xf32> to vector<8x32xbf16>
    %c0_26 = arith.constant 0 : index
    %c0_27 = arith.constant 0 : index
    %64 = vector.load %arg9[%c0_26, %c0_27] : memref<32x32xbf16, #tpu.memory_space<vmem>>, vector<32x32xbf16>
    %cst_28 = arith.constant dense<0.000000e+00> : vector<8x32xf32>
    %65 = tpu.matmul %63, %64, %cst_28 {dimension_numbers = #tpu.dot_dimension_numbers<[1], [1], [0], [0], [0, 0, 1, 0], [], []>} : vector<8x32xbf16>, vector<32x32xbf16>, vector<8x32xf32> -> vector<8x32xf32>
    %c0_29 = arith.constant 0 : index
    %c0_30 = arith.constant 0 : index
    %66 = vector.load %arg10[%c0_29, %c0_30] : memref<1x32xf32, #tpu.memory_space<vmem>>, vector<1x32xf32>
    %67 = vector.broadcast %66 : vector<1x32xf32> to vector<8x32xf32>
    %68 = arith.addf %65, %67 : vector<8x32xf32>
    %c0_31 = arith.constant 0 : index
    %c0_32 = arith.constant 0 : index
    %69 = vector.load %arg11[%c0_31, %c0_32] : memref<8x32xf32, #tpu.memory_space<vmem>>, vector<8x32xf32>
    tpu.vector_store %arg11[%c0_31, %c0_32], %68 {strides = array<i32>} : memref<8x32xf32, #tpu.memory_space<vmem>>, vector<8x32xf32>,
    return
  }
  func.func @transform_0(%arg0: i32) -> (i32, i32, i32) {
    %c0_i32 = arith.constant 0 : i32
    %c0_i32_0 = arith.constant 0 : i32
    %c0_i32_1 = arith.constant 0 : i32
    return %arg0, %c0_i32, %c0_i32_0 : i32, i32, i32
  }
  func.func @transform_1(%arg0: i32) -> (i32, i32) {
    %c0_i32 = arith.constant 0 : i32
    %c0_i32_0 = arith.constant 0 : i32
    %c0_i32_1 = arith.constant 0 : i32
    return %c0_i32, %c0_i32_0 : i32, i32
  }
  func.func @transform_2(%arg0: i32) -> (i32, i32) {
    %c0_i32 = arith.constant 0 : i32
    %c0_i32_0 = arith.constant 0 : i32
    %c0_i32_1 = arith.constant 0 : i32
    return %c0_i32, %c0_i32_0 : i32, i32
  }
  func.func @transform_3(%arg0: i32) -> (i32, i32) {
    %c0_i32 = arith.constant 0 : i32
    %c0_i32_0 = arith.constant 0 : i32
    %c0_i32_1 = arith.constant 0 : i32
    return %c0_i32, %c0_i32_0 : i32, i32
  }
  func.func @transform_4(%arg0: i32) -> (i32, i32) {
    %c0_i32 = arith.constant 0 : i32
    %c0_i32_0 = arith.constant 0 : i32
    %c0_i32_1 = arith.constant 0 : i32
    return %c0_i32, %c0_i32_0 : i32, i32
  }
  func.func @transform_5(%arg0: i32) -> (i32, i32) {
    %c0_i32 = arith.constant 0 : i32
    %c0_i32_0 = arith.constant 0 : i32
    %c0_i32_1 = arith.constant 0 : i32
    return %c0_i32, %c0_i32_0 : i32, i32
  }
  func.func @transform_6(%arg0: i32) -> (i32, i32) {
    %c0_i32 = arith.constant 0 : i32
    %c0_i32_0 = arith.constant 0 : i32
    %c0_i32_1 = arith.constant 0 : i32
    return %c0_i32, %c0_i32_0 : i32, i32
  }
  func.func @transform_7(%arg0: i32) -> (i32, i32) {
    %c0_i32 = arith.constant 0 : i32
    %c0_i32_0 = arith.constant 0 : i32
    %c0_i32_1 = arith.constant 0 : i32
    return %c0_i32, %c0_i32_0 : i32, i32
  }
  func.func @transform_8(%arg0: i32) -> (i32, i32) {
    %c0_i32 = arith.constant 0 : i32
    %c0_i32_0 = arith.constant 0 : i32
    %c0_i32_1 = arith.constant 0 : i32
    return %c0_i32, %c0_i32_0 : i32, i32
  }
  func.func @transform_9(%arg0: i32) -> (i32, i32) {
    %c0_i32 = arith.constant 0 : i32
    %c0_i32_0 = arith.constant 0 : i32
    %c0_i32_1 = arith.constant 0 : i32
    return %c0_i32, %c0_i32_0 : i32, i32
  }
  func.func @transform_10(%arg0: i32) -> (i32, i32) {
    %c0_i32 = arith.constant 0 : i32
    %c0_i32_0 = arith.constant 0 : i32
    return %arg0, %c0_i32 : i32, i32
  }
}

</mosaic_0001>

<llo_original>
// kernel: tpu_custom_call.1
$region0: #{tpu_custom_call.1}
  #allocation0 [shape = 'u32[]', space=smem, size = 0x4, offset = 0x4, fixed_abs, tag = 'smem constant byte address 0x4 - core index']
  #allocation1 [shape = 'u32[72,128]{1,0:T(1,128)}', space=vmem, size = 0x9000, scoped, tag = 'internal scratch']
  %s0 = inlined_call_operand.vmem [shape: bf16[8,16,32], index: 0, kind: input, shape index: {}]
  %s1 = inlined_call_operand.vmem [shape: f32[1,32], index: 1, kind: input, shape index: {}]
  %s2 = inlined_call_operand.hbm [shape: bf16[16,32], index: 2, kind: input, shape index: {}]
  %s3 = inlined_call_operand.vmem [shape: f32[32,4], index: 3, kind: input, shape index: {}]
  %s4 = inlined_call_operand.hbm [shape: bf16[32,32], index: 4, kind: input, shape index: {}]
  %s5 = inlined_call_operand.vmem [shape: f32[1,32], index: 5, kind: input, shape index: {}]
  %s6 = inlined_call_operand.vmem [shape: bf16[64,32], index: 6, kind: input, shape index: {}]
  %s7 = inlined_call_operand.vmem [shape: f32[1,64], index: 7, kind: input, shape index: {}]
  %s8 = inlined_call_operand.hbm [shape: bf16[32,32], index: 8, kind: input, shape index: {}]
  %s9 = inlined_call_operand.vmem [shape: f32[1,32], index: 9, kind: input, shape index: {}]
  %s10 = inlined_call_operand.hbm [shape: f32[8,32], index: 10, kind: output, shape index: {}]
  %s11 = sld [smem:[#allocation0]]
  $region62: #{tpu_custom_call.1} parent=0
    _
  %s13 = ssub.s32 1, %s11
  %s14 = scalar_select 0, %s13, %s11
  $region1: #{tpu_custom_call.1} parent=0
    #allocation2 [shape = 'u8[4096]{0}', space=vmem, size = 0x1000, scoped, tag = 'input window, operand 2, single buffered']
    #allocation3 [shape = 's32[1]{0}', space=sflag, size = 0x4, scoped, tag = 'scoped memory for tpu_custom_call.1']
    #allocation4 [shape = 's32[1]{0}', space=sflag, size = 0x4, scoped, tag = 'scoped memory for tpu_custom_call.1']
    #allocation5 [shape = 'u8[8192]{0}', space=vmem, size = 0x2000, scoped, tag = 'input window, operand 4, single buffered']
    #allocation6 [shape = 's32[1]{0}', space=sflag, size = 0x4, scoped, tag = 'scoped memory for tpu_custom_call.1']
    #allocation7 [shape = 'u8[8192]{0}', space=vmem, size = 0x2000, scoped, tag = 'input window, operand 8, single buffered']
    #allocation8 [shape = 'u8[4096]{0}', space=vmem, size = 0x1000, scoped, tag = 'output window, operand 0, single buffered']
    %15 = vsyncpa [#allocation3], 0
    %16 = vsyncpa [#allocation6], 0
    %17 = vsyncpa [#allocation4], 0
    // Predicated region
    $region2: #{tpu_custom_call.1} parent=1 // pred_check
      _
    $region3: #{tpu_custom_call.1} parent=1 // pred_check_branch
      %19 = sbr.rel (0) target = $region5
    $region4: #{tpu_custom_call.1} parent=1 // pred_region
      _
    $region5: #{tpu_custom_call.1} parent=1 // pred_fallthru
      _
    // Predicated region
    $region6: #{tpu_custom_call.1} parent=1 // pred_check
      _
    $region7: #{tpu_custom_call.1} parent=1 // pred_check_branch
      %21 = sbr.rel (0) target = $region9
    $region8: #{tpu_custom_call.1} parent=1 // pred_region
      _
    $region9: #{tpu_custom_call.1} parent=1 // pred_fallthru
      _
    // Predicated region
    $region10: #{tpu_custom_call.1} parent=1 // pred_check
      _
    $region11: #{tpu_custom_call.1} parent=1 // pred_check_branch
      %23 = sbr.rel (0) target = $region13
    $region12: #{tpu_custom_call.1} parent=1 // pred_region
      %25 = vsyncadd [#allocation3], 0
      %s26 = sshll.u32 %s2, 4
      %s27 = int_to_ptr.hbm [resolvable:$true] %s26
      %s28 = sshll.u32 [#allocation2], 4
      %s29 = int_to_ptr.vmem [resolvable:$true] %s28
      %34 = dma.hbm_to_vmem [thread:$0]  %s27, 128, %s29, [#allocation3], 64, 64, 4
    $region13: #{tpu_custom_call.1} parent=1 // pred_fallthru
      _
    // Predicated region
    $region14: #{tpu_custom_call.1} parent=1 // pred_check
      _
    $region15: #{tpu_custom_call.1} parent=1 // pred_check_branch
      %36 = sbr.rel (0) target = $region17
    $region16: #{tpu_custom_call.1} parent=1 // pred_region
      _
    $region17: #{tpu_custom_call.1} parent=1 // pred_fallthru
      _
    // Predicated region
    $region18: #{tpu_custom_call.1} parent=1 // pred_check
      _
    $region19: #{tpu_custom_call.1} parent=1 // pred_check_branch
      %38 = sbr.rel (0) target = $region21
    $region20: #{tpu_custom_call.1} parent=1 // pred_region
      %40 = vsyncadd [#allocation6], 0
      %s41 = sshll.u32 %s4, 4
      %s42 = int_to_ptr.hbm [resolvable:$true] %s41
      %s43 = sshll.u32 [#allocation5], 4
      %s44 = int_to_ptr.vmem [resolvable:$true] %s43
      %49 = dma.hbm_to_vmem [thread:$0]  %s42, 256, %s44, [#allocation6], 64, 64, 4
    $region21: #{tpu_custom_call.1} parent=1 // pred_fallthru
      _
    // Predicated region
    $region22: #{tpu_custom_call.1} parent=1 // pred_check
      _
    $region23: #{tpu_custom_call.1} parent=1 // pred_check_branch
      %51 = sbr.rel (0) target = $region25
    $region24: #{tpu_custom_call.1} parent=1 // pred_region
      _
    $region25: #{tpu_custom_call.1} parent=1 // pred_fallthru
      _
    // Predicated region
    $region26: #{tpu_custom_call.1} parent=1 // pred_check
      _
    $region27: #{tpu_custom_call.1} parent=1 // pred_check_branch
      %53 = sbr.rel (0) target = $region29
    $region28: #{tpu_custom_call.1} parent=1 // pred_region
      _
    $region29: #{tpu_custom_call.1} parent=1 // pred_fallthru
      _
    // Predicated region
    $region30: #{tpu_custom_call.1} parent=1 // pred_check
      _
    $region31: #{tpu_custom_call.1} parent=1 // pred_check_branch
      %55 = sbr.rel (0) target = $region33
    $region32: #{tpu_custom_call.1} parent=1 // pred_region
      _
    $region33: #{tpu_custom_call.1} parent=1 // pred_fallthru
      _
    // Predicated region
    $region34: #{tpu_custom_call.1} parent=1 // pred_check
      _
    $region35: #{tpu_custom_call.1} parent=1 // pred_check_branch
      %57 = sbr.rel (0) target = $region37
    $region36: #{tpu_custom_call.1} parent=1 // pred_region
      %59 = vsyncadd [#allocation6], 0
      %s60 = sshll.u32 %s8, 4
      %s61 = int_to_ptr.hbm [resolvable:$true] %s60
      %s62 = sshll.u32 [#allocation7], 4
      %s63 = int_to_ptr.vmem [resolvable:$true] %s62
      %68 = dma.hbm_to_vmem [thread:$0]  %s61, 256, %s63, [#allocation6], 64, 64, 4
    $region37: #{tpu_custom_call.1} parent=1 // pred_fallthru
      _
    // Predicated region
    $region38: #{tpu_custom_call.1} parent=1 // pred_check
      _
    $region39: #{tpu_custom_call.1} parent=1 // pred_check_branch
      %70 = sbr.rel (0) target = $region41
    $region40: #{tpu_custom_call.1} parent=1 // pred_region
      _
    $region41: #{tpu_custom_call.1} parent=1 // pred_fallthru
      _
    // Predicated region
    $region42: #{tpu_custom_call.1} parent=1 // pred_check
      _
    $region43: #{tpu_custom_call.1} parent=1 // pred_check_branch
      %72 = sbr.rel (0) target = $region45
    $region44: #{tpu_custom_call.1} parent=1 // pred_region
      %74 = dma.done [#allocation3], 128
    $region45: #{tpu_custom_call.1} parent=1 // pred_fallthru
      _
    // Predicated region
    $region46: #{tpu_custom_call.1} parent=1 // pred_check
      _
    $region47: #{tpu_custom_call.1} parent=1 // pred_check_branch
      %76 = sbr.rel (0) target = $region49
    $region48: #{tpu_custom_call.1} parent=1 // pred_region
      %78 = dma.done [#allocation6], 256
    $region49: #{tpu_custom_call.1} parent=1 // pred_fallthru
      _
    // Predicated region
    $region50: #{tpu_custom_call.1} parent=1 // pred_check
      _
    $region51: #{tpu_custom_call.1} parent=1 // pred_check_branch
      %80 = sbr.rel (0) target = $region53
    $region52: #{tpu_custom_call.1} parent=1 // pred_region
      %82 = dma.done [#allocation6], 256
    $region53: #{tpu_custom_call.1} parent=1 // pred_fallthru
      _
    %v84 = vld [vmem:[%s0] sm:$0xf]
    %v85 = vld [vmem:[%s0 + $0x4] sm:$0xf]
    %v86 = vld [vmem:[%s0 + $0x8] sm:$0xf]
    %v87 = vld [vmem:[%s0 + $0xc] sm:$0xf]
    %v88 = vld [vmem:[%s0 + $0x10] sm:$0xf]
    %v89 = vld [vmem:[%s0 + $0x14] sm:$0xf]
    %v90 = vld [vmem:[%s0 + $0x18] sm:$0xf]
    %v91 = vld [vmem:[%s0 + $0x1c] sm:$0xf]
    %v92 = vld [vmem:[%s0 + $0x20] sm:$0xf]
    %v93 = vld [vmem:[%s0 + $0x24] sm:$0xf]
    %v94 = vld [vmem:[%s0 + $0x28] sm:$0xf]
    %v95 = vld [vmem:[%s0 + $0x2c] sm:$0xf]
    %v96 = vld [vmem:[%s0 + $0x30] sm:$0xf]
    %v97 = vld [vmem:[%s0 + $0x34] sm:$0xf]
    %v98 = vld [vmem:[%s0 + $0x38] sm:$0xf]
    %v99 = vld [vmem:[%s0 + $0x3c] sm:$0xf]
    %v100 = vld [vmem:[%s3] sm:$0xff]
    %v101 = vld [vmem:[%s3 + $0x8] sm:$0xff]
    %v102 = vld [vmem:[%s3 + $0x10] sm:$0xff]
    %v103 = vld [vmem:[%s3 + $0x18] sm:$0xff]
    %v104 = vunpack.c.l.bf16 %v84
    %v105 = vunpack.c.l.bf16 %v85
    %v106 = vunpack.c.l.bf16 %v86
    %v107 = vunpack.c.l.bf16 %v87
    %v108 = vunpack.c.l.bf16 %v88
    %v109 = vunpack.c.l.bf16 %v89
    %v110 = vunpack.c.l.bf16 %v90
    %v111 = vunpack.c.l.bf16 %v91
    %v112 = vunpack.c.l.bf16 %v92
    %v113 = vunpack.c.l.bf16 %v93
    %v114 = vunpack.c.l.bf16 %v94
    %v115 = vunpack.c.l.bf16 %v95
    %v116 = vunpack.c.l.bf16 %v96
    %v117 = vunpack.c.l.bf16 %v97
    %v118 = vunpack.c.l.bf16 %v98
    %v119 = vunpack.c.l.bf16 %v99
    %vm120 = vcmask 261120
    %v121 = vsel %vm120, %v104, 0.0
    %v122 = vsel %vm120, %v105, 0.0
    %v123 = vadd.f32 %v121, %v122
    %v124 = vrot.slane %v123, 4
    %v125 = vadd.f32 %v123, %v124
    %v126 = vrot.slane %v125, 2
    %v127 = vadd.f32 %v125, %v126
    %v128 = vrot.slane %v127, 1
    %v129 = vadd.f32 %v127, %v128
    %v130 = vsel %vm120, %v106, 0.0
    %v131 = vsel %vm120, %v107, 0.0
    %v132 = vadd.f32 %v130, %v131
    %v133 = vrot.slane %v132, 4
    %v134 = vadd.f32 %v132, %v133
    %v135 = vrot.slane %v134, 2
    %v136 = vadd.f32 %v134, %v135
    %v137 = vrot.slane %v136, 1
    %v138 = vadd.f32 %v136, %v137
    %v139 = vsel %vm120, %v108, 0.0
    %v140 = vsel %vm120, %v109, 0.0
    %v141 = vadd.f32 %v139, %v140
    %v142 = vrot.slane %v141, 4
    %v143 = vadd.f32 %v141, %v142
    %v144 = vrot.slane %v143, 2
    %v145 = vadd.f32 %v143, %v144
    %v146 = vrot.slane %v145, 1
    %v147 = vadd.f32 %v145, %v146
    %v148 = vsel %vm120, %v110, 0.0
    %v149 = vsel %vm120, %v111, 0.0
    %v150 = vadd.f32 %v148, %v149
    %v151 = vrot.slane %v150, 4
    %v152 = vadd.f32 %v150, %v151
    %v153 = vrot.slane %v152, 2
    %v154 = vadd.f32 %v152, %v153
    %v155 = vrot.slane %v154, 1
    %v156 = vadd.f32 %v154, %v155
    %v157 = vsel %vm120, %v112, 0.0
    %v158 = vsel %vm120, %v113, 0.0
    %v159 = vadd.f32 %v157, %v158
    %v160 = vrot.slane %v159, 4
    %v161 = vadd.f32 %v159, %v160
    %v162 = vrot.slane %v161, 2
    %v163 = vadd.f32 %v161, %v162
    %v164 = vrot.slane %v163, 1
    %v165 = vadd.f32 %v163, %v164
    %v166 = vsel %vm120, %v114, 0.0
    %v167 = vsel %vm120, %v115, 0.0
    %v168 = vadd.f32 %v166, %v167
    %v169 = vrot.slane %v168, 4
    %v170 = vadd.f32 %v168, %v169
    %v171 = vrot.slane %v170, 2
    %v172 = vadd.f32 %v170, %v171
    %v173 = vrot.slane %v172, 1
    %v174 = vadd.f32 %v172, %v173
    %v175 = vsel %vm120, %v116, 0.0
    %v176 = vsel %vm120, %v117, 0.0
    %v177 = vadd.f32 %v175, %v176
    %v178 = vrot.slane %v177, 4
    %v179 = vadd.f32 %v177, %v178
    %v180 = vrot.slane %v179, 2
    %v181 = vadd.f32 %v179, %v180
    %v182 = vrot.slane %v181, 1
    %v183 = vadd.f32 %v181, %v182
    %v184 = vsel %vm120, %v118, 0.0
    %v185 = vsel %vm120, %v119, 0.0
    %v186 = vadd.f32 %v184, %v185
    %v187 = vrot.slane %v186, 4
    %v188 = vadd.f32 %v186, %v187
    %v189 = vrot.slane %v188, 2
    %v190 = vadd.f32 %v188, %v189
    %v191 = vrot.slane %v190, 1
    %v192 = vadd.f32 %v190, %v191
    %v193 = vrcp.pop 16.0
    %v194 = vmul.f32 16.0, %v193
    %v195 = vsub.f32 1.0, %v194
    %v196 = vmul.f32 %v193, %v195
    %v197 = vadd.f32 %v193, %v196
    %vm198 = vweird.f32 %v193
    %v199 = vsel %vm198, %v193, %v197
    %v200 = vmul.f32 %v129, %v199
    %v201 = vmul.f32 %v138, %v199
    %v202 = vmul.f32 %v147, %v199
    %v203 = vmul.f32 %v156, %v199
    %v204 = vmul.f32 %v165, %v199
    %v205 = vmul.f32 %v174, %v199
    %v206 = vmul.f32 %v183, %v199
    %v207 = vmul.f32 %v192, %v199
    %v208 = vld [vmem:[%s1] sm:$0x1]
    %v210 = vperm.slane %v208, 0
    %v212 = vadd.f32 %v200, %v210
    %v213 = vadd.f32 %v201, %v210
    %v214 = vadd.f32 %v202, %v210
    %v215 = vadd.f32 %v203, %v210
    %v216 = vadd.f32 %v204, %v210
    %v217 = vadd.f32 %v205, %v210
    %v218 = vadd.f32 %v206, %v210
    %v219 = vadd.f32 %v207, %v210
    %v220 = vpack.c.bf16 %v212, %v212
    %v221 = vpack.c.bf16 %v213, %v213
    %v222 = vpack.c.bf16 %v214, %v214
    %v223 = vpack.c.bf16 %v215, %v215
    %v224 = vpack.c.bf16 %v216, %v216
    %v225 = vpack.c.bf16 %v217, %v217
    %v226 = vpack.c.bf16 %v218, %v218
    %v227 = vpack.c.bf16 %v219, %v219
    %v228 = vld [vmem:[#allocation2] sm:$0xf]
    %v229 = vld [vmem:[#allocation2 + $0x4] sm:$0xf]
    %v230 = vunpack.c.l.bf16 %v228
    %v231 = vunpack.c.l.bf16 %v229
    %v232 = vadd.f32 %v104, %v230
    %v233 = vadd.f32 %v105, %v231
    %v234 = vadd.f32 %v106, %v230
    %v235 = vadd.f32 %v107, %v231
    %v236 = vadd.f32 %v108, %v230
    %v237 = vadd.f32 %v109, %v231
    %v238 = vadd.f32 %v110, %v230
    %v239 = vadd.f32 %v111, %v231
    %v240 = vadd.f32 %v112, %v230
    %v241 = vadd.f32 %v113, %v231
    %v242 = vadd.f32 %v114, %v230
    %v243 = vadd.f32 %v115, %v231
    %v244 = vadd.f32 %v116, %v230
    %v245 = vadd.f32 %v117, %v231
    %v246 = vadd.f32 %v118, %v230
    %v247 = vadd.f32 %v119, %v231
    %v248 = vpack.c.bf16 %v232, %v232
    %v249 = vpack.c.bf16 %v233, %v233
    %v250 = vpack.c.bf16 %v234, %v234
    %v251 = vpack.c.bf16 %v235, %v235
    %v252 = vpack.c.bf16 %v236, %v236
    %v253 = vpack.c.bf16 %v237, %v237
    %v254 = vpack.c.bf16 %v238, %v238
    %v255 = vpack.c.bf16 %v239, %v239
    %v256 = vpack.c.bf16 %v240, %v240
    %v257 = vpack.c.bf16 %v241, %v241
    %v258 = vpack.c.bf16 %v242, %v242
    %v259 = vpack.c.bf16 %v243, %v243
    %v260 = vpack.c.bf16 %v244, %v244
    %v261 = vpack.c.bf16 %v245, %v245
    %v262 = vpack.c.bf16 %v246, %v246
    %v263 = vpack.c.bf16 %v247, %v247
    %v280 = vunpack.c.l.b16 %v248
    %v281 = vunpack.c.l.b16 %v249
    %v282 = vunpack.c.l.b16 %v250
    %v283 = vunpack.c.l.b16 %v251
    %v284 = vunpack.c.l.b16 %v252
    %v285 = vunpack.c.l.b16 %v253
    %v286 = vunpack.c.l.b16 %v254
    %v287 = vunpack.c.l.b16 %v255
    %v288 = vunpack.c.l.b16 %v256
    %v289 = vunpack.c.l.b16 %v257
    %v290 = vunpack.c.l.b16 %v258
    %v291 = vunpack.c.l.b16 %v259
    %v292 = vunpack.c.l.b16 %v260
    %v293 = vunpack.c.l.b16 %v261
    %v294 = vunpack.c.l.b16 %v262
    %v295 = vunpack.c.l.b16 %v263
    %v296 = vpack.c.b16 %v281, %v280
    %v297 = vpack.c.b16 %v283, %v282
    %v298 = vpack.c.b16 %v285, %v284
    %v299 = vpack.c.b16 %v287, %v286
    %v300 = vpack.c.b16 %v289, %v288
    %v301 = vpack.c.b16 %v291, %v290
    %v302 = vpack.c.b16 %v293, %v292
    %v303 = vpack.c.b16 %v295, %v294
    %v312 = vunpack.c.l.b16 %v220
    %v313 = vunpack.c.l.b16 %v221
    %v314 = vunpack.c.l.b16 %v222
    %v315 = vunpack.c.l.b16 %v223
    %v316 = vunpack.c.l.b16 %v224
    %v317 = vunpack.c.l.b16 %v225
    %v318 = vunpack.c.l.b16 %v226
    %v319 = vunpack.c.l.b16 %v227
    %v320 = vpack.c.b16 %v312, %v312
    %v321 = vpack.c.b16 %v313, %v313
    %v322 = vpack.c.b16 %v314, %v314
    %v323 = vpack.c.b16 %v315, %v315
    %v324 = vpack.c.b16 %v316, %v316
    %v325 = vpack.c.b16 %v317, %v317
    %v326 = vpack.c.b16 %v318, %v318
    %v327 = vpack.c.b16 %v319, %v319
    %v328 = vunpack.c.l.b16 %v320
    %v329 = vunpack.c.l.b16 %v321
    %v330 = vunpack.c.l.b16 %v322
    %v331 = vunpack.c.l.b16 %v323
    %v332 = vunpack.c.l.b16 %v324
    %v333 = vunpack.c.l.b16 %v325
    %v334 = vunpack.c.l.b16 %v326
    %v335 = vunpack.c.l.b16 %v327
    %v336 = vrot.slane %v329, 7
    %vm337 = vcmask 1041409
    %v338 = vsel %vm337, %v336, %v328
    %v339 = vrot.slane %v330, 6
    %vm340 = vcmask 1042434
    %v341 = vsel %vm340, %v339, %v338
    %v342 = vrot.slane %v331, 5
    %vm343 = vcmask 1043459
    %v344 = vsel %vm343, %v342, %v341
    %v345 = vrot.slane %v332, 4
    %vm346 = vcmask 1044484
    %v347 = vsel %vm346, %v345, %v344
    %v348 = vrot.slane %v333, 3
    %vm349 = vcmask 1045509
    %v350 = vsel %vm349, %v348, %v347
    %v351 = vrot.slane %v334, 2
    %vm352 = vcmask 1046534
    %v353 = vsel %vm352, %v351, %v350
    %v354 = vrot.slane %v335, 1
    %vm355 = vcmask 1047559
    %v356 = vsel %vm355, %v354, %v353
    %v357 = vpack.c.b16 %v356, %v356
    %v358 = vld [vmem:[%s6] sm:$0xf]
    %v359 = vld [vmem:[%s6 + $0x4] sm:$0xf]
    %v360 = vld [vmem:[%s6 + $0x8] sm:$0xf]
    %v361 = vld [vmem:[%s6 + $0xc] sm:$0xf]
    %v362 = vld [vmem:[%s6 + $0x10] sm:$0xf]
    %v363 = vld [vmem:[%s6 + $0x14] sm:$0xf]
    %v364 = vld [vmem:[%s6 + $0x18] sm:$0xf]
    %v365 = vld [vmem:[%s6 + $0x1c] sm:$0xf]
    %v366 = vld [vmem:[%s7] sm:$0x1]
    %v368 = vperm.slane %v366, 0
    %v378 = vunpack.c.l.b16 %v358
    %v379 = vunpack.c.l.b16 %v359
    %v380 = vunpack.c.l.b16 %v360
    %v381 = vunpack.c.l.b16 %v361
    %v382 = vunpack.c.l.b16 %v362
    %v383 = vunpack.c.l.b16 %v363
    %v384 = vunpack.c.l.b16 %v364
    %v385 = vunpack.c.l.b16 %v365
    %v386 = vpack.c.b16 %v379, %v378
    %v387 = vpack.c.b16 %v381, %v380
    %v388 = vpack.c.b16 %v383, %v382
    %v389 = vpack.c.b16 %v385, %v384
    %v391 = vsel %vm120, %v296, 0
    %v394 = vsel %vm120, %v297, 0
    %v397 = vsel %vm120, %v298, 0
    %v400 = vsel %vm120, %v299, 0
    %v403 = vsel %vm120, %v300, 0
    %v406 = vsel %vm120, %v301, 0
    %v409 = vsel %vm120, %v302, 0
    %v412 = vsel %vm120, %v303, 0
    %v415 = vsel %vm120, %v357, 0
    %v418 = vsel %vm120, %v386, 0
    %v421 = vsel %vm120, %v387, 0
    %v424 = vsel %vm120, %v388, 0
    %v427 = vsel %vm120, %v389, 0
    %429 = vmatpush.bf16.xpose.msra.mxu0 0
    %430 = vmatpush.bf16.xpose.msra.mxu0 0
    %431 = vmatpush.bf16.xpose.msra.mxu0 0
    %432 = vmatpush.bf16.xpose.msra.mxu0 0
    %433 = vmatpush.bf16.xpose.msra.mxu0 %v427
    %434 = vmatpush.bf16.xpose.msra.mxu0 %v424
    %435 = vmatpush.bf16.xpose.msra.mxu0 %v421
    %436 = vmatpush.bf16.xpose.msra.mxu0 %v418
    %437 = vmatmul.bf16.gmra.mxu0 %v391
    %v438 = vpop.f32.mrf.mxu0
    %v439 = vadd.f32 %v368, %v438
    %v440 = vpop.f32.mrf.mxu0
    %v441 = vadd.f32 %v368, %v440
    %442 = vmatmul.bf16.gmra.mxu0 %v394
    %v443 = vpop.f32.mrf.mxu0
    %v444 = vadd.f32 %v368, %v443
    %v445 = vpop.f32.mrf.mxu0
    %v446 = vadd.f32 %v368, %v445
    %447 = vmatmul.bf16.gmra.mxu0 %v397
    %v448 = vpop.f32.mrf.mxu0
    %v449 = vadd.f32 %v368, %v448
    %v450 = vpop.f32.mrf.mxu0
    %v451 = vadd.f32 %v368, %v450
    %452 = vmatmul.bf16.gmra.mxu0 %v400
    %v453 = vpop.f32.mrf.mxu0
    %v454 = vadd.f32 %v368, %v453
    %v455 = vpop.f32.mrf.mxu0
    %v456 = vadd.f32 %v368, %v455
    %457 = vmatmul.bf16.gmra.mxu0 %v403
    %v458 = vpop.f32.mrf.mxu0
    %v459 = vadd.f32 %v368, %v458
    %v460 = vpop.f32.mrf.mxu0
    %v461 = vadd.f32 %v368, %v460
    %462 = vmatmul.bf16.gmra.mxu0 %v406
    %v463 = vpop.f32.mrf.mxu0
    %v464 = vadd.f32 %v368, %v463
    %v465 = vpop.f32.mrf.mxu0
    %v466 = vadd.f32 %v368, %v465
    %467 = vmatmul.bf16.gmra.mxu0 %v409
    %v468 = vpop.f32.mrf.mxu0
    %v469 = vadd.f32 %v368, %v468
    %v470 = vpop.f32.mrf.mxu0
    %v471 = vadd.f32 %v368, %v470
    %472 = vmatmul.bf16.gmra.mxu0 %v412
    %v473 = vpop.f32.mrf.mxu0
    %v474 = vadd.f32 %v368, %v473
    %v475 = vpop.f32.mrf.mxu0
    %v476 = vadd.f32 %v368, %v475
    %477 = vmatmul.bf16.gmra.mxu0 %v415
    %v478 = vpop.f32.mrf.mxu0
    %v479 = vadd.f32 %v368, %v478
    %v480 = vpop.f32.mrf.mxu0
    %481 = vdwg.mxu0
    %v482 = vld [vmem:[#allocation5] sm:$0xf]
    %v483 = vld [vmem:[#allocation5 + $0x4] sm:$0xf]
    %v484 = vld [vmem:[#allocation5 + $0x8] sm:$0xf]
    %v485 = vld [vmem:[#allocation5 + $0xc] sm:$0xf]
    %v486 = vld [vmem:[%s5] sm:$0x1]
    %v488 = vperm.slane %v486, 0
    %v494 = vunpack.c.l.b16 %v482
    %v495 = vunpack.c.l.b16 %v483
    %v496 = vunpack.c.l.b16 %v484
    %v497 = vunpack.c.l.b16 %v485
    %v498 = vpack.c.b16 %v495, %v494
    %v499 = vpack.c.b16 %v497, %v496
    %v501 = vsel %vm120, %v498, 0
    %v504 = vsel %vm120, %v499, 0
    %506 = vmatpush.bf16.xpose.msra.mxu0 0
    %507 = vmatpush.bf16.xpose.msra.mxu0 0
    %508 = vmatpush.bf16.xpose.msra.mxu0 0
    %509 = vmatpush.bf16.xpose.msra.mxu0 0
    %510 = vmatpush.bf16.xpose.msra.mxu0 0
    %511 = vmatpush.bf16.xpose.msra.mxu0 0
    %512 = vmatpush.bf16.xpose.msra.mxu0 %v504
    %513 = vmatpush.bf16.xpose.msra.mxu0 %v501
    %514 = vmatmul.bf16.gmra.mxu0 %v415
    %v515 = vpop.f32.mrf.mxu0
    %v516 = vadd.f32 %v488, %v515
    %v517 = vpop.f32.mrf.mxu0
    %518 = vdwg.mxu0
    %v520 = vrot.slane %v516, 1
    %v521 = vrot.slane %v516, 2
    %v522 = vrot.slane %v516, 3
    %v523 = vrot.slane %v516, 4
    %v524 = vrot.slane %v516, 5
    %v525 = vrot.slane %v516, 6
    %v526 = vrot.slane %v516, 7
    %v527 = vperm.slane %v516, 0
    %v528 = vperm.slane %v520, 0
    %v529 = vperm.slane %v521, 0
    %v530 = vperm.slane %v522, 0
    %v531 = vperm.slane %v523, 0
    %v532 = vperm.slane %v524, 0
    %v533 = vperm.slane %v525, 0
    %v534 = vperm.slane %v526, 0
    %v543 = vmul.f32 %v527, %v439
    %v544 = vmul.f32 %v527, %v441
    %v545 = vmul.f32 %v528, %v444
    %v546 = vmul.f32 %v528, %v446
    %v547 = vmul.f32 %v529, %v449
    %v548 = vmul.f32 %v529, %v451
    %v549 = vmul.f32 %v530, %v454
    %v550 = vmul.f32 %v530, %v456
    %v551 = vmul.f32 %v531, %v459
    %v552 = vmul.f32 %v531, %v461
    %v553 = vmul.f32 %v532, %v464
    %v554 = vmul.f32 %v532, %v466
    %v555 = vmul.f32 %v533, %v469
    %v556 = vmul.f32 %v533, %v471
    %v557 = vmul.f32 %v534, %v474
    %v558 = vmul.f32 %v534, %v476
    %v560 = vsel %vm120, %v543, 0
    %v563 = vsel %vm120, %v544, 0
    %v566 = vsel %vm120, %v545, 0
    %v569 = vsel %vm120, %v546, 0
    %v572 = vsel %vm120, %v547, 0
    %v575 = vsel %vm120, %v548, 0
    %v578 = vsel %vm120, %v549, 0
    %v581 = vsel %vm120, %v550, 0
    %v584 = vsel %vm120, %v551, 0
    %v587 = vsel %vm120, %v552, 0
    %v590 = vsel %vm120, %v553, 0
    %v593 = vsel %vm120, %v554, 0
    %v596 = vsel %vm120, %v555, 0
    %v599 = vsel %vm120, %v556, 0
    %v602 = vsel %vm120, %v557, 0
    %v605 = vsel %vm120, %v558, 0
    %607 = vmatpush.msra.mxu0 0.0
    %608 = vmatpush.msra.mxu0 0.0
    %609 = vmatpush.msra.mxu0 0.0
    %610 = vmatpush.msra.mxu0 0.0
    %611 = vmatpush.msra.mxu0 0.0
    %612 = vmatpush.msra.mxu0 0.0
    %613 = vmatpush.msra.mxu0 0.0
    %614 = vmatpush.msra.mxu0 0.0
    %615 = vmatpush.msra.mxu0 0.0
    %616 = vmatpush.msra.mxu0 0.0
    %617 = vmatpush.msra.mxu0 0.0
    %618 = vmatpush.msra.mxu0 0.0
    %619 = vmatpush.msra.mxu0 %v103
    %620 = vmatpush.msra.mxu0 %v102
    %621 = vmatpush.msra.mxu0 %v101
    %622 = vmatpush.msra.mxu0 %v100
    %623 = vmatmul.f32.gmra.mxu0 %v560
    %v624 = vpop.f32.mrf.mxu0
    %v625 = vadd.f32 0.0, %v624
    %626 = vmatmul.f32.gmra.mxu0 %v563
    %v627 = vpop.f32.mrf.mxu0
    %v628 = vadd.f32 0.0, %v627
    %629 = vmatmul.f32.gmra.mxu0 %v566
    %v630 = vpop.f32.mrf.mxu0
    %v631 = vadd.f32 0.0, %v630
    %632 = vmatmul.f32.gmra.mxu0 %v569
    %v633 = vpop.f32.mrf.mxu0
    %v634 = vadd.f32 0.0, %v633
    %635 = vmatmul.f32.gmra.mxu0 %v572
    %v636 = vpop.f32.mrf.mxu0
    %v637 = vadd.f32 0.0, %v636
    %638 = vmatmul.f32.gmra.mxu0 %v575
    %v639 = vpop.f32.mrf.mxu0
    %v640 = vadd.f32 0.0, %v639
    %641 = vmatmul.f32.gmra.mxu0 %v578
    %v642 = vpop.f32.mrf.mxu0
    %v643 = vadd.f32 0.0, %v642
    %644 = vmatmul.f32.gmra.mxu0 %v581
    %v645 = vpop.f32.mrf.mxu0
    %v646 = vadd.f32 0.0, %v645
    %647 = vmatmul.f32.gmra.mxu0 %v584
    %v648 = vpop.f32.mrf.mxu0
    %v649 = vadd.f32 0.0, %v648
    %650 = vmatmul.f32.gmra.mxu0 %v587
    %v651 = vpop.f32.mrf.mxu0
    %v652 = vadd.f32 0.0, %v651
    %653 = vmatmul.f32.gmra.mxu0 %v590
    %v654 = vpop.f32.mrf.mxu0
    %v655 = vadd.f32 0.0, %v654
    %656 = vmatmul.f32.gmra.mxu0 %v593
    %v657 = vpop.f32.mrf.mxu0
    %v658 = vadd.f32 0.0, %v657
    %659 = vmatmul.f32.gmra.mxu0 %v596
    %v660 = vpop.f32.mrf.mxu0
    %v661 = vadd.f32 0.0, %v660
    %662 = vmatmul.f32.gmra.mxu0 %v599
    %v663 = vpop.f32.mrf.mxu0
    %v664 = vadd.f32 0.0, %v663
    %665 = vmatmul.f32.gmra.mxu0 %v602
    %v666 = vpop.f32.mrf.mxu0
    %v667 = vadd.f32 0.0, %v666
    %668 = vmatmul.f32.gmra.mxu0 %v605
    %v669 = vpop.f32.mrf.mxu0
    %v670 = vadd.f32 0.0, %v669
    %671 = vdwg.mxu0
    %v672 = vmul.f32 %v516, %v479
    %v674 = vsel %vm120, %v672, 0
    %676 = vmatpush.msra.mxu0 0.0
    %677 = vmatpush.msra.mxu0 0.0
    %678 = vmatpush.msra.mxu0 0.0
    %679 = vmatpush.msra.mxu0 0.0
    %680 = vmatpush.msra.mxu0 0.0
    %681 = vmatpush.msra.mxu0 0.0
    %682 = vmatpush.msra.mxu0 0.0
    %683 = vmatpush.msra.mxu0 0.0
    %684 = vmatpush.msra.mxu0 0.0
    %685 = vmatpush.msra.mxu0 0.0
    %686 = vmatpush.msra.mxu0 0.0
    %687 = vmatpush.msra.mxu0 0.0
    %688 = vmatpush.msra.mxu0 %v103
    %689 = vmatpush.msra.mxu0 %v102
    %690 = vmatpush.msra.mxu0 %v101
    %691 = vmatpush.msra.mxu0 %v100
    %692 = vmatmul.f32.gmra.mxu0 %v674
    %v693 = vpop.f32.mrf.mxu0
    %v694 = vadd.f32 0.0, %v693
    %695 = vdwg.mxu0
    %vm696 = vcmask 31744
    %v697 = vsel %vm696, %v625, -inf
    %v698 = vsel %vm696, %v628, -inf
    %v699 = vmax.f32 %v697, %v698
    %v700 = vrot.slane %v699, 4
    %v701 = vmax.f32 %v699, %v700
    %v702 = vrot.slane %v701, 2
    %v703 = vmax.f32 %v701, %v702
    %v704 = vrot.slane %v703, 1
    %v705 = vmax.f32 %v703, %v704
    %v706 = vsel %vm696, %v631, -inf
    %v707 = vsel %vm696, %v634, -inf
    %v708 = vmax.f32 %v706, %v707
    %v709 = vrot.slane %v708, 4
    %v710 = vmax.f32 %v708, %v709
    %v711 = vrot.slane %v710, 2
    %v712 = vmax.f32 %v710, %v711
    %v713 = vrot.slane %v712, 1
    %v714 = vmax.f32 %v712, %v713
    %v715 = vsel %vm696, %v637, -inf
    %v716 = vsel %vm696, %v640, -inf
    %v717 = vmax.f32 %v715, %v716
    %v718 = vrot.slane %v717, 4
    %v719 = vmax.f32 %v717, %v718
    %v720 = vrot.slane %v719, 2
    %v721 = vmax.f32 %v719, %v720
    %v722 = vrot.slane %v721, 1
    %v723 = vmax.f32 %v721, %v722
    %v724 = vsel %vm696, %v643, -inf
    %v725 = vsel %vm696, %v646, -inf
    %v726 = vmax.f32 %v724, %v725
    %v727 = vrot.slane %v726, 4
    %v728 = vmax.f32 %v726, %v727
    %v729 = vrot.slane %v728, 2
    %v730 = vmax.f32 %v728, %v729
    %v731 = vrot.slane %v730, 1
    %v732 = vmax.f32 %v730, %v731
    %v733 = vsel %vm696, %v649, -inf
    %v734 = vsel %vm696, %v652, -inf
    %v735 = vmax.f32 %v733, %v734
    %v736 = vrot.slane %v735, 4
    %v737 = vmax.f32 %v735, %v736
    %v738 = vrot.slane %v737, 2
    %v739 = vmax.f32 %v737, %v738
    %v740 = vrot.slane %v739, 1
    %v741 = vmax.f32 %v739, %v740
    %v742 = vsel %vm696, %v655, -inf
    %v743 = vsel %vm696, %v658, -inf
    %v744 = vmax.f32 %v742, %v743
    %v745 = vrot.slane %v744, 4
    %v746 = vmax.f32 %v744, %v745
    %v747 = vrot.slane %v746, 2
    %v748 = vmax.f32 %v746, %v747
    %v749 = vrot.slane %v748, 1
    %v750 = vmax.f32 %v748, %v749
    %v751 = vsel %vm696, %v661, -inf
    %v752 = vsel %vm696, %v664, -inf
    %v753 = vmax.f32 %v751, %v752
    %v754 = vrot.slane %v753, 4
    %v755 = vmax.f32 %v753, %v754
    %v756 = vrot.slane %v755, 2
    %v757 = vmax.f32 %v755, %v756
    %v758 = vrot.slane %v757, 1
    %v759 = vmax.f32 %v757, %v758
    %v760 = vsel %vm696, %v667, -inf
    %v761 = vsel %vm696, %v670, -inf
    %v762 = vmax.f32 %v760, %v761
    %v763 = vrot.slane %v762, 4
    %v764 = vmax.f32 %v762, %v763
    %v765 = vrot.slane %v764, 2
    %v766 = vmax.f32 %v764, %v765
    %v767 = vrot.slane %v766, 1
    %v768 = vmax.f32 %v766, %v767
    %v770 = vrot.slane %v694, 1
    %v771 = vrot.slane %v694, 2
    %v772 = vrot.slane %v694, 3
    %v773 = vrot.slane %v694, 4
    %v774 = vrot.slane %v694, 5
    %v775 = vrot.slane %v694, 6
    %v776 = vrot.slane %v694, 7
    %v785 = vmax.f32 %v705, %v694
    %v786 = vmax.f32 %v714, %v770
    %v787 = vmax.f32 %v723, %v771
    %v788 = vmax.f32 %v732, %v772
    %v789 = vmax.f32 %v741, %v773
    %v790 = vmax.f32 %v750, %v774
    %v791 = vmax.f32 %v759, %v775
    %v792 = vmax.f32 %v768, %v776
    %v793 = vperm.slane %v785, 0
    %v794 = vperm.slane %v786, 0
    %v795 = vperm.slane %v787, 0
    %v796 = vperm.slane %v788, 0
    %v797 = vperm.slane %v789, 0
    %v798 = vperm.slane %v790, 0
    %v799 = vperm.slane %v791, 0
    %v800 = vperm.slane %v792, 0
    %v801 = vsub.f32 %v625, %v793
    %v802 = vsub.f32 %v628, %v793
    %v803 = vsub.f32 %v631, %v794
    %v804 = vsub.f32 %v634, %v794
    %v805 = vsub.f32 %v637, %v795
    %v806 = vsub.f32 %v640, %v795
    %v807 = vsub.f32 %v643, %v796
    %v808 = vsub.f32 %v646, %v796
    %v809 = vsub.f32 %v649, %v797
    %v810 = vsub.f32 %v652, %v797
    %v811 = vsub.f32 %v655, %v798
    %v812 = vsub.f32 %v658, %v798
    %v813 = vsub.f32 %v661, %v799
    %v814 = vsub.f32 %v664, %v799
    %v815 = vsub.f32 %v667, %v800
    %v816 = vsub.f32 %v670, %v800
    %v817 = vmul.f32 %v801, 1.442695
    %v818 = vpow.pop %v817
    %v819 = vmul.f32 %v802, 1.442695
    %v820 = vpow.pop %v819
    %v821 = vmul.f32 %v803, 1.442695
    %v822 = vpow.pop %v821
    %v823 = vmul.f32 %v804, 1.442695
    %v824 = vpow.pop %v823
    %v825 = vmul.f32 %v805, 1.442695
    %v826 = vpow.pop %v825
    %v827 = vmul.f32 %v806, 1.442695
    %v828 = vpow.pop %v827
    %v829 = vmul.f32 %v807, 1.442695
    %v830 = vpow.pop %v829
    %v831 = vmul.f32 %v808, 1.442695
    %v832 = vpow.pop %v831
    %v833 = vmul.f32 %v809, 1.442695
    %v834 = vpow.pop %v833
    %v835 = vmul.f32 %v810, 1.442695
    %v836 = vpow.pop %v835
    %v837 = vmul.f32 %v811, 1.442695
    %v838 = vpow.pop %v837
    %v839 = vmul.f32 %v812, 1.442695
    %v840 = vpow.pop %v839
    %v841 = vmul.f32 %v813, 1.442695
    %v842 = vpow.pop %v841
    %v843 = vmul.f32 %v814, 1.442695
    %v844 = vpow.pop %v843
    %v845 = vmul.f32 %v815, 1.442695
    %v846 = vpow.pop %v845
    %v847 = vmul.f32 %v816, 1.442695
    %v848 = vpow.pop %v847
    %v857 = vrot.slane %v786, 7
    %v858 = vsel %vm337, %v857, %v785
    %v859 = vrot.slane %v787, 6
    %v860 = vsel %vm340, %v859, %v858
    %v861 = vrot.slane %v788, 5
    %v862 = vsel %vm343, %v861, %v860
    %v863 = vrot.slane %v789, 4
    %v864 = vsel %vm346, %v863, %v862
    %v865 = vrot.slane %v790, 3
    %v866 = vsel %vm349, %v865, %v864
    %v867 = vrot.slane %v791, 2
    %v868 = vsel %vm352, %v867, %v866
    %v869 = vrot.slane %v792, 1
    %v870 = vsel %vm355, %v869, %v868
    %v872 = vsub.f32 %v694, %v870
    %v873 = vmul.f32 %v872, 1.442695
    %v874 = vpow.pop %v873
    %v875 = vsel %vm696, %v818, 0.0
    %v876 = vsel %vm696, %v820, 0.0
    %v877 = vadd.f32 %v875, %v876
    %v878 = vrot.slane %v877, 4
    %v879 = vadd.f32 %v877, %v878
    %v880 = vrot.slane %v879, 2
    %v881 = vadd.f32 %v879, %v880
    %v882 = vrot.slane %v881, 1
    %v883 = vadd.f32 %v881, %v882
    %v884 = vsel %vm696, %v822, 0.0
    %v885 = vsel %vm696, %v824, 0.0
    %v886 = vadd.f32 %v884, %v885
    %v887 = vrot.slane %v886, 4
    %v888 = vadd.f32 %v886, %v887
    %v889 = vrot.slane %v888, 2
    %v890 = vadd.f32 %v888, %v889
    %v891 = vrot.slane %v890, 1
    %v892 = vadd.f32 %v890, %v891
    %v893 = vsel %vm696, %v826, 0.0
    %v894 = vsel %vm696, %v828, 0.0
    %v895 = vadd.f32 %v893, %v894
    %v896 = vrot.slane %v895, 4
    %v897 = vadd.f32 %v895, %v896
    %v898 = vrot.slane %v897, 2
    %v899 = vadd.f32 %v897, %v898
    %v900 = vrot.slane %v899, 1
    %v901 = vadd.f32 %v899, %v900
    %v902 = vsel %vm696, %v830, 0.0
    %v903 = vsel %vm696, %v832, 0.0
    %v904 = vadd.f32 %v902, %v903
    %v905 = vrot.slane %v904, 4
    %v906 = vadd.f32 %v904, %v905
    %v907 = vrot.slane %v906, 2
    %v908 = vadd.f32 %v906, %v907
    %v909 = vrot.slane %v908, 1
    %v910 = vadd.f32 %v908, %v909
    %v911 = vsel %vm696, %v834, 0.0
    %v912 = vsel %vm696, %v836, 0.0
    %v913 = vadd.f32 %v911, %v912
    %v914 = vrot.slane %v913, 4
    %v915 = vadd.f32 %v913, %v914
    %v916 = vrot.slane %v915, 2
    %v917 = vadd.f32 %v915, %v916
    %v918 = vrot.slane %v917, 1
    %v919 = vadd.f32 %v917, %v918
    %v920 = vsel %vm696, %v838, 0.0
    %v921 = vsel %vm696, %v840, 0.0
    %v922 = vadd.f32 %v920, %v921
    %v923 = vrot.slane %v922, 4
    %v924 = vadd.f32 %v922, %v923
    %v925 = vrot.slane %v924, 2
    %v926 = vadd.f32 %v924, %v925
    %v927 = vrot.slane %v926, 1
    %v928 = vadd.f32 %v926, %v927
    %v929 = vsel %vm696, %v842, 0.0
    %v930 = vsel %vm696, %v844, 0.0
    %v931 = vadd.f32 %v929, %v930
    %v932 = vrot.slane %v931, 4
    %v933 = vadd.f32 %v931, %v932
    %v934 = vrot.slane %v933, 2
    %v935 = vadd.f32 %v933, %v934
    %v936 = vrot.slane %v935, 1
    %v937 = vadd.f32 %v935, %v936
    %v938 = vsel %vm696, %v846, 0.0
    %v939 = vsel %vm696, %v848, 0.0
    %v940 = vadd.f32 %v938, %v939
    %v941 = vrot.slane %v940, 4
    %v942 = vadd.f32 %v940, %v941
    %v943 = vrot.slane %v942, 2
    %v944 = vadd.f32 %v942, %v943
    %v945 = vrot.slane %v944, 1
    %v946 = vadd.f32 %v944, %v945
    %v948 = vrot.slane %v874, 1
    %v949 = vrot.slane %v874, 2
    %v950 = vrot.slane %v874, 3
    %v951 = vrot.slane %v874, 4
    %v952 = vrot.slane %v874, 5
    %v953 = vrot.slane %v874, 6
    %v954 = vrot.slane %v874, 7
    %v963 = vadd.f32 %v883, %v874
    %v964 = vadd.f32 %v892, %v948
    %v965 = vadd.f32 %v901, %v949
    %v966 = vadd.f32 %v910, %v950
    %v967 = vadd.f32 %v919, %v951
    %v968 = vadd.f32 %v928, %v952
    %v969 = vadd.f32 %v937, %v953
    %v970 = vadd.f32 %v946, %v954
    %v971 = vrcp.pop %v963
    %v972 = vrcp.pop %v964
    %v973 = vrcp.pop %v965
    %v974 = vrcp.pop %v966
    %v975 = vrcp.pop %v967
    %v976 = vrcp.pop %v968
    %v977 = vrcp.pop %v969
    %v978 = vrcp.pop %v970
    %v979 = vperm.slane %v971, 0
    %v980 = vperm.slane %v972, 0
    %v981 = vperm.slane %v973, 0
    %v982 = vperm.slane %v974, 0
    %v983 = vperm.slane %v975, 0
    %v984 = vperm.slane %v976, 0
    %v985 = vperm.slane %v977, 0
    %v986 = vperm.slane %v978, 0
    %v987 = vmul.f32 %v818, %v979
    %v988 = vmul.f32 %v820, %v979
    %v989 = vmul.f32 %v822, %v980
    %v990 = vmul.f32 %v824, %v980
    %v991 = vmul.f32 %v826, %v981
    %v992 = vmul.f32 %v828, %v981
    %v993 = vmul.f32 %v830, %v982
    %v994 = vmul.f32 %v832, %v982
    %v995 = vmul.f32 %v834, %v983
    %v996 = vmul.f32 %v836, %v983
    %v997 = vmul.f32 %v838, %v984
    %v998 = vmul.f32 %v840, %v984
    %v999 = vmul.f32 %v842, %v985
    %v1000 = vmul.f32 %v844, %v985
    %v1001 = vmul.f32 %v846, %v986
    %v1002 = vmul.f32 %v848, %v986
    %v1011 = vrot.slane %v972, 7
    %v1012 = vsel %vm337, %v1011, %v971
    %v1013 = vrot.slane %v973, 6
    %v1014 = vsel %vm340, %v1013, %v1012
    %v1015 = vrot.slane %v974, 5
    %v1016 = vsel %vm343, %v1015, %v1014
    %v1017 = vrot.slane %v975, 4
    %v1018 = vsel %vm346, %v1017, %v1016
    %v1019 = vrot.slane %v976, 3
    %v1020 = vsel %vm349, %v1019, %v1018
    %v1021 = vrot.slane %v977, 2
    %v1022 = vsel %vm352, %v1021, %v1020
    %v1023 = vrot.slane %v978, 1
    %v1024 = vsel %vm355, %v1023, %v1022
    %v1026 = vmul.f32 %v874, %v1024
    %v1028 = vsel %vm696, %v987, 0
    %v1031 = vsel %vm696, %v988, 0
    %v1034 = vsel %vm696, %v989, 0
    %v1037 = vsel %vm696, %v990, 0
    %v1040 = vsel %vm696, %v991, 0
    %v1043 = vsel %vm696, %v992, 0
    %v1046 = vsel %vm696, %v993, 0
    %v1049 = vsel %vm696, %v994, 0
    %v1052 = vsel %vm696, %v995, 0
    %v1055 = vsel %vm696, %v996, 0
    %v1058 = vsel %vm696, %v997, 0
    %v1061 = vsel %vm696, %v998, 0
    %v1064 = vsel %vm696, %v999, 0
    %v1067 = vsel %vm696, %v1000, 0
    %v1070 = vsel %vm696, %v1001, 0
    %v1073 = vsel %vm696, %v1002, 0
    %v1076 = vsel %vm696, %v100, 0
    %v1079 = vsel %vm696, %v101, 0
    %v1082 = vsel %vm696, %v102, 0
    %v1085 = vsel %vm696, %v103, 0
    %1087 = vmatpush.xpose.msra.mxu0 0.0
    %1088 = vmatpush.xpose.msra.mxu0 0.0
    %1089 = vmatpush.xpose.msra.mxu0 0.0
    %1090 = vmatpush.xpose.msra.mxu0 0.0
    %1091 = vmatpush.xpose.msra.mxu0 0.0
    %1092 = vmatpush.xpose.msra.mxu0 0.0
    %1093 = vmatpush.xpose.msra.mxu0 0.0
    %1094 = vmatpush.xpose.msra.mxu0 0.0
    %1095 = vmatpush.xpose.msra.mxu0 0.0
    %1096 = vmatpush.xpose.msra.mxu0 0.0
    %1097 = vmatpush.xpose.msra.mxu0 0.0
    %1098 = vmatpush.xpose.msra.mxu0 0.0
    %1099 = vmatpush.xpose.msra.mxu0 %v1085
    %1100 = vmatpush.xpose.msra.mxu0 %v1082
    %1101 = vmatpush.xpose.msra.mxu0 %v1079
    %1102 = vmatpush.xpose.msra.mxu0 %v1076
    %1103 = vmatmul.f32.gmra.mxu0 %v1028
    %v1104 = vpop.f32.mrf.mxu0
    %v1105 = vadd.f32 0.0, %v1104
    %1106 = vmatmul.f32.gmra.mxu0 %v1031
    %v1107 = vpop.f32.mrf.mxu0
    %v1108 = vadd.f32 0.0, %v1107
    %1109 = vmatmul.f32.gmra.mxu0 %v1034
    %v1110 = vpop.f32.mrf.mxu0
    %v1111 = vadd.f32 0.0, %v1110
    %1112 = vmatmul.f32.gmra.mxu0 %v1037
    %v1113 = vpop.f32.mrf.mxu0
    %v1114 = vadd.f32 0.0, %v1113
    %1115 = vmatmul.f32.gmra.mxu0 %v1040
    %v1116 = vpop.f32.mrf.mxu0
    %v1117 = vadd.f32 0.0, %v1116
    %1118 = vmatmul.f32.gmra.mxu0 %v1043
    %v1119 = vpop.f32.mrf.mxu0
    %v1120 = vadd.f32 0.0, %v1119
    %1121 = vmatmul.f32.gmra.mxu0 %v1046
    %v1122 = vpop.f32.mrf.mxu0
    %v1123 = vadd.f32 0.0, %v1122
    %1124 = vmatmul.f32.gmra.mxu0 %v1049
    %v1125 = vpop.f32.mrf.mxu0
    %v1126 = vadd.f32 0.0, %v1125
    %1127 = vmatmul.f32.gmra.mxu0 %v1052
    %v1128 = vpop.f32.mrf.mxu0
    %v1129 = vadd.f32 0.0, %v1128
    %1130 = vmatmul.f32.gmra.mxu0 %v1055
    %v1131 = vpop.f32.mrf.mxu0
    %v1132 = vadd.f32 0.0, %v1131
    %1133 = vmatmul.f32.gmra.mxu0 %v1058
    %v1134 = vpop.f32.mrf.mxu0
    %v1135 = vadd.f32 0.0, %v1134
    %1136 = vmatmul.f32.gmra.mxu0 %v1061
    %v1137 = vpop.f32.mrf.mxu0
    %v1138 = vadd.f32 0.0, %v1137
    %1139 = vmatmul.f32.gmra.mxu0 %v1064
    %v1140 = vpop.f32.mrf.mxu0
    %v1141 = vadd.f32 0.0, %v1140
    %1142 = vmatmul.f32.gmra.mxu0 %v1067
    %v1143 = vpop.f32.mrf.mxu0
    %v1144 = vadd.f32 0.0, %v1143
    %1145 = vmatmul.f32.gmra.mxu0 %v1070
    %v1146 = vpop.f32.mrf.mxu0
    %v1147 = vadd.f32 0.0, %v1146
    %1148 = vmatmul.f32.gmra.mxu0 %v1073
    %v1149 = vpop.f32.mrf.mxu0
    %v1150 = vadd.f32 0.0, %v1149
    %1151 = vdwg.mxu0
    %v1153 = vsel %vm696, %v1026, 0
    %1155 = vmatpush.xpose.msra.mxu0 0.0
    %1156 = vmatpush.xpose.msra.mxu0 0.0
    %1157 = vmatpush.xpose.msra.mxu0 0.0
    %1158 = vmatpush.xpose.msra.mxu0 0.0
    %1159 = vmatpush.xpose.msra.mxu0 0.0
    %1160 = vmatpush.xpose.msra.mxu0 0.0
    %1161 = vmatpush.xpose.msra.mxu0 0.0
    %1162 = vmatpush.xpose.msra.mxu0 0.0
    %1163 = vmatpush.xpose.msra.mxu0 0.0
    %1164 = vmatpush.xpose.msra.mxu0 0.0
    %1165 = vmatpush.xpose.msra.mxu0 0.0
    %1166 = vmatpush.xpose.msra.mxu0 0.0
    %1167 = vmatpush.xpose.msra.mxu0 %v1085
    %1168 = vmatpush.xpose.msra.mxu0 %v1082
    %1169 = vmatpush.xpose.msra.mxu0 %v1079
    %1170 = vmatpush.xpose.msra.mxu0 %v1076
    %1171 = vmatmul.f32.gmra.mxu0 %v1153
    %v1172 = vpop.f32.mrf.mxu0
    %v1173 = vadd.f32 0.0, %v1172
    %1174 = vdwg.mxu0
    %1191 = vrot.lane.b32.xlu0 %v439, 96
    %v1192 = vpop.permute.xlu0 %1191
    %1193 = vrot.lane.b32.xlu0 %v441, 96
    %v1194 = vpop.permute.xlu0 %1193
    %1195 = vrot.lane.b32.xlu0 %v444, 96
    %v1196 = vpop.permute.xlu0 %1195
    %1197 = vrot.lane.b32.xlu0 %v446, 96
    %v1198 = vpop.permute.xlu0 %1197
    %1199 = vrot.lane.b32.xlu0 %v449, 96
    %v1200 = vpop.permute.xlu0 %1199
    %1201 = vrot.lane.b32.xlu0 %v451, 96
    %v1202 = vpop.permute.xlu0 %1201
    %1203 = vrot.lane.b32.xlu0 %v454, 96
    %v1204 = vpop.permute.xlu0 %1203
    %1205 = vrot.lane.b32.xlu0 %v456, 96
    %v1206 = vpop.permute.xlu0 %1205
    %1207 = vrot.lane.b32.xlu0 %v459, 96
    %v1208 = vpop.permute.xlu0 %1207
    %1209 = vrot.lane.b32.xlu0 %v461, 96
    %v1210 = vpop.permute.xlu0 %1209
    %1211 = vrot.lane.b32.xlu0 %v464, 96
    %v1212 = vpop.permute.xlu0 %1211
    %1213 = vrot.lane.b32.xlu0 %v466, 96
    %v1214 = vpop.permute.xlu0 %1213
    %1215 = vrot.lane.b32.xlu0 %v469, 96
    %v1216 = vpop.permute.xlu0 %1215
    %1217 = vrot.lane.b32.xlu0 %v471, 96
    %v1218 = vpop.permute.xlu0 %1217
    %1219 = vrot.lane.b32.xlu0 %v474, 96
    %v1220 = vpop.permute.xlu0 %1219
    %1221 = vrot.lane.b32.xlu0 %v476, 96
    %v1222 = vpop.permute.xlu0 %1221
    %v1239 = vmul.f32 %v1105, %v1192
    %v1240 = vmul.f32 %v1108, %v1194
    %v1241 = vmul.f32 %v1111, %v1196
    %v1242 = vmul.f32 %v1114, %v1198
    %v1243 = vmul.f32 %v1117, %v1200
    %v1244 = vmul.f32 %v1120, %v1202
    %v1245 = vmul.f32 %v1123, %v1204
    %v1246 = vmul.f32 %v1126, %v1206
    %v1247 = vmul.f32 %v1129, %v1208
    %v1248 = vmul.f32 %v1132, %v1210
    %v1249 = vmul.f32 %v1135, %v1212
    %v1250 = vmul.f32 %v1138, %v1214
    %v1251 = vmul.f32 %v1141, %v1216
    %v1252 = vmul.f32 %v1144, %v1218
    %v1253 = vmul.f32 %v1147, %v1220
    %v1254 = vmul.f32 %v1150, %v1222
    %v1255 = vsel %vm120, %v1239, 0.0
    %v1256 = vsel %vm120, %v1240, 0.0
    %v1257 = vadd.f32 %v1255, %v1256
    %v1258 = vrot.slane %v1257, 4
    %v1259 = vadd.f32 %v1257, %v1258
    %v1260 = vrot.slane %v1259, 2
    %v1261 = vadd.f32 %v1259, %v1260
    %v1262 = vrot.slane %v1261, 1
    %v1263 = vadd.f32 %v1261, %v1262
    %v1264 = vsel %vm120, %v1241, 0.0
    %v1265 = vsel %vm120, %v1242, 0.0
    %v1266 = vadd.f32 %v1264, %v1265
    %v1267 = vrot.slane %v1266, 4
    %v1268 = vadd.f32 %v1266, %v1267
    %v1269 = vrot.slane %v1268, 2
    %v1270 = vadd.f32 %v1268, %v1269
    %v1271 = vrot.slane %v1270, 1
    %v1272 = vadd.f32 %v1270, %v1271
    %v1273 = vsel %vm120, %v1243, 0.0
    %v1274 = vsel %vm120, %v1244, 0.0
    %v1275 = vadd.f32 %v1273, %v1274
    %v1276 = vrot.slane %v1275, 4
    %v1277 = vadd.f32 %v1275, %v1276
    %v1278 = vrot.slane %v1277, 2
    %v1279 = vadd.f32 %v1277, %v1278
    %v1280 = vrot.slane %v1279, 1
    %v1281 = vadd.f32 %v1279, %v1280
    %v1282 = vsel %vm120, %v1245, 0.0
    %v1283 = vsel %vm120, %v1246, 0.0
    %v1284 = vadd.f32 %v1282, %v1283
    %v1285 = vrot.slane %v1284, 4
    %v1286 = vadd.f32 %v1284, %v1285
    %v1287 = vrot.slane %v1286, 2
    %v1288 = vadd.f32 %v1286, %v1287
    %v1289 = vrot.slane %v1288, 1
    %v1290 = vadd.f32 %v1288, %v1289
    %v1291 = vsel %vm120, %v1247, 0.0
    %v1292 = vsel %vm120, %v1248, 0.0
    %v1293 = vadd.f32 %v1291, %v1292
    %v1294 = vrot.slane %v1293, 4
    %v1295 = vadd.f32 %v1293, %v1294
    %v1296 = vrot.slane %v1295, 2
    %v1297 = vadd.f32 %v1295, %v1296
    %v1298 = vrot.slane %v1297, 1
    %v1299 = vadd.f32 %v1297, %v1298
    %v1300 = vsel %vm120, %v1249, 0.0
    %v1301 = vsel %vm120, %v1250, 0.0
    %v1302 = vadd.f32 %v1300, %v1301
    %v1303 = vrot.slane %v1302, 4
    %v1304 = vadd.f32 %v1302, %v1303
    %v1305 = vrot.slane %v1304, 2
    %v1306 = vadd.f32 %v1304, %v1305
    %v1307 = vrot.slane %v1306, 1
    %v1308 = vadd.f32 %v1306, %v1307
    %v1309 = vsel %vm120, %v1251, 0.0
    %v1310 = vsel %vm120, %v1252, 0.0
    %v1311 = vadd.f32 %v1309, %v1310
    %v1312 = vrot.slane %v1311, 4
    %v1313 = vadd.f32 %v1311, %v1312
    %v1314 = vrot.slane %v1313, 2
    %v1315 = vadd.f32 %v1313, %v1314
    %v1316 = vrot.slane %v1315, 1
    %v1317 = vadd.f32 %v1315, %v1316
    %v1318 = vsel %vm120, %v1253, 0.0
    %v1319 = vsel %vm120, %v1254, 0.0
    %v1320 = vadd.f32 %v1318, %v1319
    %v1321 = vrot.slane %v1320, 4
    %v1322 = vadd.f32 %v1320, %v1321
    %v1323 = vrot.slane %v1322, 2
    %v1324 = vadd.f32 %v1322, %v1323
    %v1325 = vrot.slane %v1324, 1
    %v1326 = vadd.f32 %v1324, %v1325
    %1328 = vrot.lane.b32.xlu0 %v479, 96
    %v1329 = vpop.permute.xlu0 %1328
    %v1331 = vmul.f32 %v1173, %v1329
    %v1333 = vrot.slane %v1331, 1
    %v1334 = vrot.slane %v1331, 2
    %v1335 = vrot.slane %v1331, 3
    %v1336 = vrot.slane %v1331, 4
    %v1337 = vrot.slane %v1331, 5
    %v1338 = vrot.slane %v1331, 6
    %v1339 = vrot.slane %v1331, 7
    %v1348 = vadd.f32 %v1263, %v1331
    %v1349 = vadd.f32 %v1272, %v1333
    %v1350 = vadd.f32 %v1281, %v1334
    %v1351 = vadd.f32 %v1290, %v1335
    %v1352 = vadd.f32 %v1299, %v1336
    %v1353 = vadd.f32 %v1308, %v1337
    %v1354 = vadd.f32 %v1317, %v1338
    %v1355 = vadd.f32 %v1326, %v1339
    %v1356 = vpack.c.bf16 %v1348, %v1348
    %v1357 = vpack.c.bf16 %v1349, %v1349
    %v1358 = vpack.c.bf16 %v1350, %v1350
    %v1359 = vpack.c.bf16 %v1351, %v1351
    %v1360 = vpack.c.bf16 %v1352, %v1352
    %v1361 = vpack.c.bf16 %v1353, %v1353
    %v1362 = vpack.c.bf16 %v1354, %v1354
    %v1363 = vpack.c.bf16 %v1355, %v1355
    %v1364 = vld [vmem:[#allocation7] sm:$0xf]
    %v1365 = vld [vmem:[#allocation7 + $0x4] sm:$0xf]
    %v1366 = vld [vmem:[#allocation7 + $0x8] sm:$0xf]
    %v1367 = vld [vmem:[#allocation7 + $0xc] sm:$0xf]
    %v1368 = vld [vmem:[%s9] sm:$0x1]
    %v1370 = vperm.slane %v1368, 0
    %v1380 = vunpack.c.l.b16 %v1356
    %v1381 = vunpack.c.l.b16 %v1357
    %v1382 = vunpack.c.l.b16 %v1358
    %v1383 = vunpack.c.l.b16 %v1359
    %v1384 = vunpack.c.l.b16 %v1360
    %v1385 = vunpack.c.l.b16 %v1361
    %v1386 = vunpack.c.l.b16 %v1362
    %v1387 = vunpack.c.l.b16 %v1363
    %v1388 = vrot.slane %v1381, 7
    %v1389 = vsel %vm337, %v1388, %v1380
    %v1390 = vrot.slane %v1382, 6
    %v1391 = vsel %vm340, %v1390, %v1389
    %v1392 = vrot.slane %v1383, 5
    %v1393 = vsel %vm343, %v1392, %v1391
    %v1394 = vrot.slane %v1384, 4
    %v1395 = vsel %vm346, %v1394, %v1393
    %v1396 = vrot.slane %v1385, 3
    %v1397 = vsel %vm349, %v1396, %v1395
    %v1398 = vrot.slane %v1386, 2
    %v1399 = vsel %vm352, %v1398, %v1397
    %v1400 = vrot.slane %v1387, 1
    %v1401 = vsel %vm355, %v1400, %v1399
    %v1402 = vpack.c.b16 %v1401, %v1401
    %v1407 = vunpack.c.l.b16 %v1364
    %v1408 = vunpack.c.l.b16 %v1365
    %v1409 = vunpack.c.l.b16 %v1366
    %v1410 = vunpack.c.l.b16 %v1367
    %v1411 = vpack.c.b16 %v1408, %v1407
    %v1412 = vpack.c.b16 %v1410, %v1409
    %v1414 = vsel %vm120, %v1402, 0
    %v1417 = vsel %vm120, %v1411, 0
    %v1420 = vsel %vm120, %v1412, 0
    %1422 = vmatpush.bf16.xpose.msra.mxu0 0
    %1423 = vmatpush.bf16.xpose.msra.mxu0 0
    %1424 = vmatpush.bf16.xpose.msra.mxu0 0
    %1425 = vmatpush.bf16.xpose.msra.mxu0 0
    %1426 = vmatpush.bf16.xpose.msra.mxu0 0
    %1427 = vmatpush.bf16.xpose.msra.mxu0 0
    %1428 = vmatpush.bf16.xpose.msra.mxu0 %v1420
    %1429 = vmatpush.bf16.xpose.msra.mxu0 %v1417
    %1430 = vmatmul.bf16.gmra.mxu0 %v1414
    %v1431 = vpop.f32.mrf.mxu0
    %v1432 = vadd.f32 %v1370, %v1431
    %v1433 = vpop.f32.mrf.mxu0
    %1434 = vdwg.mxu0
    %1435 = vst.msk [vmem:[#allocation8] sm:$0xff] %vm120, %v1432
    // Predicated region
    $region54: #{tpu_custom_call.1} parent=1 // pred_check
      _
    $region55: #{tpu_custom_call.1} parent=1 // pred_check_branch
      %1437 = sbr.rel (0) target = $region57
    $region56: #{tpu_custom_call.1} parent=1 // pred_region
      %1439 = vsyncadd [#allocation4], 0
      %s1441 = sshll.u32 [#allocation8], 4
      %s1442 = int_to_ptr.vmem [resolvable:$true] %s1441
      %s1443 = sshll.u32 %s10, 4
      %s1444 = int_to_ptr.hbm [resolvable:$true] %s1443
      %1446 = dma.vmem_to_hbm [thread:$0]  %s1442, 128, %s1444, [#allocation4]
    $region57: #{tpu_custom_call.1} parent=1 // pred_fallthru
      _
    // Predicated region
    $region58: #{tpu_custom_call.1} parent=1 // pred_check
      _
    $region59: #{tpu_custom_call.1} parent=1 // pred_check_branch
      %1448 = sbr.rel (0) target = $region61
    $region60: #{tpu_custom_call.1} parent=1 // pred_region
      %1450 = dma.done [#allocation4], 128
    $region61: #{tpu_custom_call.1} parent=1 // pred_fallthru
      _
    %1451 = vsyncpa [#allocation3], 1
    %1452 = vsyncpa [#allocation6], 1
    %1453 = vsyncpa [#allocation4], 1

</llo_original>
